<compile_context>
chip_gen: v6e
topology: v6e:2x2x1
jax: 0.10.0
libtpu: 0.0.40
codegen_flags: <defaults>
</compile_context>

<pallas_src>
import functools

import jax
import jax.numpy as jnp
from jax.experimental import pallas as pl
from jax.experimental.pallas import tpu as pltpu

_SUBLANE_BF16 = 16  # bf16 packs (16, 128) per vreg -> 16-row tile granule


def _round_up(x, m):
    return (x + m - 1) // m * m


# ---------------------------------------------------------------------------
# Pallas kernel: one MXU matmul per grid step of a (tm, C) content slab against
# the fully resident (C, D) weight block.  bf16 operands, f32 accumulation.
# ---------------------------------------------------------------------------
def _content_matmul_kernel(a_ref, w_ref, o_ref):
    a = a_ref[...].astype(jnp.bfloat16)        # no-op when content is stored bf16
    w = w_ref[...].astype(jnp.bfloat16)        # W is tiny; in-kernel cast is free
    o_ref[...] = jnp.dot(a, w, preferred_element_type=jnp.float32)


@functools.partial(jax.jit, static_argnames=("tm",))
def content_matmul(content, w, *, tm=512):
    """item_content @ W via Pallas.

    No wrapper-side cast / pad / slice passes over the dominant tensor; ragged
    item counts are handled by Pallas edge-block masking.
    """
    m, k = content.shape
    k2, n = w.shape
    assert k == k2, "inner dims must match"

    a_itemsize = jnp.dtype(content.dtype).itemsize
    w_itemsize = jnp.dtype(w.dtype).itemsize

    # --- tile-size selection --------------------------------------------------
    # (a) don't overshoot small item tables
    tm = min(tm, _round_up(m, _SUBLANE_BF16))
    # (b) keep >= 2 grid steps so both v7x TensorCores get work ("parallel" axis)
    if m > _SUBLANE_BF16:
        tm = min(tm, _round_up(pl.cdiv(m, 2), _SUBLANE_BF16))
    # (c) keep the double-buffered content stream under ~12 MiB so the default
    #     scoped-VMEM limits (v5e 16 MiB, v7x 32 MiB) are never exceeded.
    vmem_budget = 12 * 1024 * 1024
    max_tm = max(
        _SUBLANE_BF16,
        (vmem_budget // (2 * k * a_itemsize)) // _SUBLANE_BF16 * _SUBLANE_BF16,
    )
    tm = max(_SUBLANE_BF16, min(tm, max_tm))
    # (d) tiny-M fallback: a block equal to the full array dim is always legal
    if tm >= m:
        tm = m

    grid = (pl.cdiv(m, tm),)

    cost = pl.CostEstimate(
        flops=2 * m * k * n,
        bytes_accessed=m * k * a_itemsize + k * n * w_itemsize + m * n * 4,
        transcendentals=0,
    )

    return pl.pallas_call(
        _content_matmul_kernel,
        out_shape=jax.ShapeDtypeStruct((m, n), jnp.float32),
        grid_spec=pltpu.PrefetchScalarGridSpec(
            num_scalar_prefetch=0,
            grid=grid,
            in_specs=[
                # streamed / double-buffered content slab: (tm, full-K)
                pl.BlockSpec((tm, k), lambda i: (i, 0)),
                # whole W resident in VMEM for every step (constant index_map)
                pl.BlockSpec((k, n), lambda i: (0, 0)),
            ],
            # lane dim == full latent dim (no 128 padding, no trailing slice)
            out_specs=pl.BlockSpec((tm, n), lambda i: (i, 0)),
        ),
        compiler_params=pltpu.CompilerParams(
            # independent rows -> shards across TensorCores on v7x
            dimension_semantics=("parallel",),
        ),
        cost_estimate=cost,
    )(content, w)


# ---------------------------------------------------------------------------
# Parameter init (deterministic, mirrors the module shapes).
# ---------------------------------------------------------------------------
def xavier_uniform(key, shape, dtype=jnp.float32):
    fan_in, fan_out = shape
    bound = (6.0 / (fan_in + fan_out)) ** 0.5
    return jax.random.uniform(key, shape, dtype, minval=-bound, maxval=bound)


def init_vbpr_params(key, user_num, item_num, content_dim, latent_size):
    k1, k2, k3, k4, k5 = jax.random.split(key, 5)
    return {
        # TODO(synk): original loads P/Q from .pt checkpoints; substituted with
        #             deterministic random values of the same shape/dtype.
        "P": jax.random.normal(k1, (user_num, latent_size), jnp.float32) * 0.1,
        "Q": jax.random.normal(k2, (item_num, latent_size), jnp.float32) * 0.1,
        "PQ2": xavier_uniform(k3, (user_num, latent_size)),
        "W": xavier_uniform(k4, (content_dim, latent_size)),
        # Frozen item features (requires_grad=False in torch): cast to bf16 ONCE
        # here so every forward streams 2 B/elem with no per-call conversion.
        "item_content": jax.random.normal(
            k5, (item_num, content_dim), jnp.float32
        ).astype(jnp.bfloat16),
    }


def vbpr_forward(params):
    """Equivalent of VBPR_Learner.forward() with cold_object == 'item'."""
    user_emb_main = params["P"]
    item_emb_main = params["Q"]
    user_emb_aux = params["PQ2"]
    # hot path: item_content @ W inside the Pallas kernel (bf16 stream, f32 acc)
    item_emb_aux = content_matmul(params["item_content"], params["W"])
    return user_emb_main, item_emb_main, user_emb_aux, item_emb_aux, params["W"]


if __name__ == "__main__":
    # Small shapes consistent with the module. item_num is deliberately NOT a
    # tile multiple to exercise the ragged edge block (masked writes).
    user_num = 64
    item_num = 200
    content_dim = 256
    latent_size = 32

    key = jax.random.PRNGKey(0)
    params = init_vbpr_params(key, user_num, item_num, content_dim, latent_size)

    outs = jax.block_until_ready(vbpr_forward(params))
    user_emb_main, item_emb_main, user_emb_aux, item_emb_aux, W = outs

    # shape / dtype checks
    assert user_emb_main.shape == (user_num, latent_size)
    assert item_emb_main.shape == (item_num, latent_size)
    assert user_emb_aux.shape == (user_num, latent_size)
    assert item_emb_aux.shape == (item_num, latent_size)
    assert W.shape == (content_dim, latent_size)
    assert item_emb_aux.dtype == jnp.float32

    # correctness vs. same-precision reference (bf16 operands, f32 accumulation)
    ref_bf16 = jnp.dot(
        params["item_content"],
        params["W"].astype(jnp.bfloat16),
        preferred_element_type=jnp.float32,
    )
    assert jnp.allclose(item_emb_aux, ref_bf16, atol=1e-3, rtol=1e-3)

    # loose check vs the full-f32 torch semantics (bf16-rounding only)
    ref_f32 = params["item_content"].astype(jnp.float32) @ params["W"]
    assert jnp.allclose(item_emb_aux, ref_f32, atol=5e-2, rtol=5e-2)

    print("KERNEL_OK")
</pallas_src>

<mosaic_0001>
module attributes {stable_mosaic.version = 11 : i64} {
  func.func @_content_matmul_kernel(%arg0: i32, %arg1: memref<112x256xbf16, #tpu.memory_space<vmem>>, %arg2: memref<256x32xf32, #tpu.memory_space<vmem>>, %arg3: memref<112x32xf32, #tpu.memory_space<vmem>>) attributes {dimension_semantics = [#tpu.dimension_semantics<parallel>], iteration_bounds = array<i64: 2>, scalar_prefetch = 0 : i64, scratch_operands = 0 : i64, tpu.core_type = #tpu.core_type<tc>, window_params = [{transform_indices = @transform_0, window_bounds = array<i64: 112, 256>}, {pipeline_mode = #tpu.pipeline_mode<synchronous>, transform_indices = @transform_1, window_bounds = array<i64: 256, 32>}, {transform_indices = @transform_2, window_bounds = array<i64: 112, 32>}]} {
    %c0 = arith.constant 0 : index
    %c0_0 = arith.constant 0 : index
    %0 = vector.load %arg1[%c0, %c0_0] : memref<112x256xbf16, #tpu.memory_space<vmem>>, vector<112x256xbf16>
    %c0_1 = arith.constant 0 : index
    %c0_2 = arith.constant 0 : index
    %1 = vector.load %arg2[%c0_1, %c0_2] : memref<256x32xf32, #tpu.memory_space<vmem>>, vector<256x32xf32>
    %2 = arith.truncf %1 : vector<256x32xf32> to vector<256x32xbf16>
    %cst = arith.constant dense<0.000000e+00> : vector<112x32xf32>
    %3 = tpu.matmul %0, %2, %cst {dimension_numbers = #tpu.dot_dimension_numbers<[1], [0], [0], [1], [0, 0, 1, 1], [], []>} : vector<112x256xbf16>, vector<256x32xbf16>, vector<112x32xf32> -> vector<112x32xf32>
    %c0_3 = arith.constant 0 : index
    %c0_4 = arith.constant 0 : index
    %4 = vector.load %arg3[%c0_3, %c0_4] : memref<112x32xf32, #tpu.memory_space<vmem>>, vector<112x32xf32>
    tpu.vector_store %arg3[%c0_3, %c0_4], %3 {strides = array<i32>} : memref<112x32xf32, #tpu.memory_space<vmem>>, vector<112x32xf32>,
    return
  }
  func.func @transform_0(%arg0: i32) -> (i32, i32) {
    %c0_i32 = arith.constant 0 : i32
    %c0_i32_0 = arith.constant 0 : i32
    return %arg0, %c0_i32 : i32, i32
  }
  func.func @transform_1(%arg0: i32) -> (i32, i32) {
    %c0_i32 = arith.constant 0 : i32
    %c0_i32_0 = arith.constant 0 : i32
    %c0_i32_1 = arith.constant 0 : i32
    return %c0_i32, %c0_i32_0 : i32, i32
  }
  func.func @transform_2(%arg0: i32) -> (i32, i32) {
    %c0_i32 = arith.constant 0 : i32
    %c0_i32_0 = arith.constant 0 : i32
    return %arg0, %c0_i32 : i32, i32
  }
}

</mosaic_0001>

<llo_original>
// kernel: content_matmul.1
$region0: #{content_matmul.1}
  #allocation0 [shape = 'u32[]', space=smem, size = 0x4, offset = 0x4, fixed_abs, tag = 'smem constant byte address 0x4 - core index']
  #allocation1 [shape = 'u32[144,128]{1,0:T(1,128)}', space=vmem, size = 0x12000, scoped, tag = 'internal scratch']
  %s0 = inlined_call_operand.vmem [shape: bf16[200,256], index: 0, kind: input, shape index: {}]
  %s1 = inlined_call_operand.vmem [shape: f32[256,32], index: 1, kind: input, shape index: {}]
  %s2 = inlined_call_operand.vmem [shape: f32[200,32], index: 2, kind: output, shape index: {}]
  %s3 = sld [smem:[#allocation0]]
  $region89: #{content_matmul.1} parent=0
    _
  %s5 = ssub.s32 1, %s3
  %s6 = scalar_select 0, %s5, %s3
  $region1: #{content_matmul.1} parent=0
    #allocation2 [shape = 'u8[114688]{0}', space=vmem, size = 0x1c000, scoped, tag = 'output window, operand 0']
    loop: start=0, step=1, limit=4
    $region2: #{content_matmul.1} parent=1 // loop_pre_header
      _
    $region3: #{content_matmul.1} parent=1 // loop_header
      %s8 = sphi 0, %s12
      %p9 = scmp.ge.s32.totalorder %s8, 4
      %s18 = sphi 0, %s20
      %s21 = sphi 0, %s18
      %s22 = sphi 0, %s21
      %s38 = sphi 0, %s22
      %s42 = sphi 0, %s42
      %s44 = sphi 0, %s42
      %s45 = sphi 0, %s44
      %s59 = sphi 0, %s45
      %s65 = sphi 0, %s67
      %s68 = sphi 0, %s65
      %s69 = sphi 0, %s68
      %s85 = sphi 0, %s69
    $region4: #{content_matmul.1} parent=1 // loop_header_branch
      %11 = sbr.rel (%p9) target = $region8
    $region5: #{content_matmul.1} parent=1 // loop_body
      %s13 = ssub.s32 %s8, 1
      %s14 = ssub.s32 %s8, 2
      %s15 = sadd.s32 %s8, 1
      %s16 = ssub.s32 %s8, %s15
      %p17 = scmp.eq.s32.totalorder %s16, 0
      %s19 = sadd.s32 %s18, 1
      %s20 = scalar_select %p17, %s18, %s19
      %p23 = pneg %p17
      %p24 = scmp.eq.s32.totalorder %s8, 1
      %p25 = por %p23, %p24
      %p26 = scmp.ne.s32.totalorder %s18, %s21
      %p27 = scmp.eq.s32.totalorder %s8, 0
      %p28 = por %p26, %p27
      %p29 = scmp.ne.s32.totalorder %s18, %s21
      %p30 = scmp.eq.s32.totalorder %s13, 1
      %p31 = por %p29, %p30
      %p32 = scmp.ne.s32.totalorder %s21, %s22
      %p33 = scmp.eq.s32.totalorder %s13, 0
      %p34 = por %p32, %p33
      %p35 = scmp.ne.s32.totalorder %s21, %s22
      %p36 = scmp.eq.s32.totalorder %s14, 1
      %p37 = por %p35, %p36
      %p39 = scmp.ne.s32.totalorder %s22, %s38
      %p40 = scmp.eq.s32.totalorder %s14, 0
      %p41 = por %p39, %p40
      %s43 = sadd.s32 %s42, 1
      %p46 = scmp.eq.s32.totalorder %s8, 1
      %p47 = scmp.ne.s32.totalorder %s42, %s44
      %p48 = scmp.eq.s32.totalorder %s8, 0
      %p49 = por %p47, %p48
      %p50 = scmp.ne.s32.totalorder %s42, %s44
      %p51 = scmp.eq.s32.totalorder %s13, 1
      %p52 = por %p50, %p51
      %p53 = scmp.ne.s32.totalorder %s44, %s45
      %p54 = scmp.eq.s32.totalorder %s13, 0
      %p55 = por %p53, %p54
      %p56 = scmp.ne.s32.totalorder %s44, %s45
      %p57 = scmp.eq.s32.totalorder %s14, 1
      %p58 = por %p56, %p57
      %p60 = scmp.ne.s32.totalorder %s45, %s59
      %p61 = scmp.eq.s32.totalorder %s14, 0
      %p62 = por %p60, %p61
      %s63 = ssub.s32 %s8, %s15
      %p64 = scmp.eq.s32.totalorder %s63, 0
      %s66 = sadd.s32 %s65, 1
      %s67 = scalar_select %p64, %s65, %s66
      %p70 = pneg %p64
      %p71 = scmp.eq.s32.totalorder %s8, 1
      %p72 = por %p70, %p71
      %p73 = scmp.ne.s32.totalorder %s65, %s68
      %p74 = scmp.eq.s32.totalorder %s8, 0
      %p75 = por %p73, %p74
      %p76 = scmp.ne.s32.totalorder %s65, %s68
      %p77 = scmp.eq.s32.totalorder %s13, 1
      %p78 = por %p76, %p77
      %p79 = scmp.ne.s32.totalorder %s68, %s69
      %p80 = scmp.eq.s32.totalorder %s13, 0
      %p81 = por %p79, %p80
      %p82 = scmp.ne.s32.totalorder %s68, %s69
      %p83 = scmp.eq.s32.totalorder %s14, 1
      %p84 = por %p82, %p83
      %p86 = scmp.ne.s32.totalorder %s69, %s85
      %p87 = scmp.eq.s32.totalorder %s14, 0
      %p88 = por %p86, %p87
      %p89 = scmp.le.s32.totalorder 1, %s8
      %p90 = scmp.lt.s32.totalorder %s8, 3
      %p91 = pnand %p89, %p90
      %p92 = pneg %p91
      // Predicated region
      $region9: #{content_matmul.1} parent=5 // pred_check
        _
      $region10: #{content_matmul.1} parent=5 // pred_check_branch
        %94 = sbr.rel (%p91) target = $region12
      $region11: #{content_matmul.1} parent=5 // pred_region
        %s95 = ssub.s32 %s8, 1
        // Predicated region
        $region13: #{content_matmul.1} parent=11 // pred_check
          %p96 = pneg %p55
        $region14: #{content_matmul.1} parent=11 // pred_check_branch
          %98 = sbr.rel (%p96) target = $region16
        $region15: #{content_matmul.1} parent=11 // pred_region
          _
        $region16: #{content_matmul.1} parent=11 // pred_fallthru
          _
      $region12: #{content_matmul.1} parent=5 // pred_fallthru
        _
      %p99 = scmp.lt.s32.totalorder %s8, 2
      // Predicated region
      $region17: #{content_matmul.1} parent=5 // pred_check
        %p100 = pneg %p99
      $region18: #{content_matmul.1} parent=5 // pred_check_branch
        %102 = sbr.rel (%p100) target = $region20
      $region19: #{content_matmul.1} parent=5 // pred_region
        // Predicated region
        $region21: #{content_matmul.1} parent=19 // pred_check
          %p103 = pneg %p28
        $region22: #{content_matmul.1} parent=19 // pred_check_branch
          %105 = sbr.rel (%p103) target = $region24
        $region23: #{content_matmul.1} parent=19 // pred_region
          %s106 = smul.u32 14, %s8
          %s107 = ssub.s32 25, %s106
          %p108 = scmp.lt.s32.totalorder %s107, 14
          %s109 = scalar_select %p108, %s107, 14
          %s110 = smul.u32 64, %s109
          %s111 = smul.u32 %s110, 2
          %p112 = scmp.lt.s32.totalorder %s106, 24
          %s113 = scalar_select %p112, %s106, 24
          %s114 = smul.addr %s113, 2
          %s115 = smul.addr %s114, 4
          %s116 = scalar_lea.vmem %s0, %s115
          %s117 = smul.u32 14, %s8
          %s118 = ssub.s32 25, %s117
          %p119 = scmp.lt.s32.totalorder %s118, 14
          %s120 = scalar_select %p119, %s118, 14
          %s121 = smul.u32 64, %s120
          %s122 = smul.u32 %s121, 2
        $region24: #{content_matmul.1} parent=19 // pred_fallthru
          _
      $region20: #{content_matmul.1} parent=5 // pred_fallthru
        _
      %p123 = scmp.le.s32.totalorder 1, %s8
      %p124 = scmp.lt.s32.totalorder %s8, 3
      %p125 = pnand %p123, %p124
      %p126 = pneg %p125
      // Predicated region
      $region25: #{content_matmul.1} parent=5 // pred_check
        _
      $region26: #{content_matmul.1} parent=5 // pred_check_branch
        %128 = sbr.rel (%p125) target = $region28
      $region27: #{content_matmul.1} parent=5 // pred_region
        %s129 = ssub.s32 %s8, 1
        %s130 = smul.u32 14, %s13
        %s131 = ssub.s32 25, %s130
        %p132 = scmp.lt.s32.totalorder %s131, 14
        %s133 = scalar_select %p132, %s131, 14
        %s134 = smul.u32 64, %s133
        %s135 = smul.u32 %s134, 2
        %p136 = scmp.lt.s32.totalorder %s130, 24
        %s137 = scalar_select %p136, %s130, 24
        %s138 = smul.addr %s137, 2
        %s139 = smul.addr %s138, 4
        %s140 = scalar_lea.vmem %s0, %s139
        %p141 = pneg %p34
        %p142 = pneg %p31
        %p143 = pneg %p55
        %p144 = pneg %p52
        %p145 = pneg %p81
        %p146 = pneg %p78
        %s147 = sand.u32 %s68, 1
        %s148 = sand.u32 %s68, 1
        %s149 = smul.addr %s148, 112
        %s150 = scalar_lea.vmem [#allocation2], %s149
        %s151 = smul.u32 14, %s13
        %s152 = ssub.s32 25, %s151
        %p153 = scmp.lt.s32.totalorder %s152, 14
        %s154 = scalar_select %p153, %s152, 14
        %s155 = smul.u32 64, %s154
        %s156 = smul.u32 %s155, 2
        %p157 = scmp.lt.s32.totalorder %s151, 24
        %s158 = scalar_select %p157, %s151, 24
        %s159 = smul.addr %s158, 2
        %s160 = smul.addr %s159, 4
        %s161 = scalar_lea.vmem %s0, %s160
        %s162 = smul.u32 14, %s13
        %s163 = ssub.s32 25, %s162
        %p164 = scmp.lt.s32.totalorder %s163, 14
        %s165 = scalar_select %p164, %s163, 14
        %s166 = smul.u32 64, %s165
        %s167 = smul.u32 %s166, 2
        %s168 = smul.u32 14, %s13
        %s169 = ssub.s32 25, %s168
        %p170 = scmp.lt.s32.totalorder %s169, 14
        %s171 = scalar_select %p170, %s169, 14
        %s172 = smul.u32 128, %s171
        %v174 = vld [vmem:[%s161] sm:$0xff]
        %v175 = vld [vmem:[%s161 + $0x8] sm:$0xff]
        %v176 = vld [vmem:[%s161 + $0x10] sm:$0xff]
        %v177 = vld [vmem:[%s161 + $0x18] sm:$0xff]
        %v178 = vld [vmem:[%s161 + $0x20] sm:$0xff]
        %v179 = vld [vmem:[%s161 + $0x28] sm:$0xff]
        %v180 = vld [vmem:[%s161 + $0x30] sm:$0xff]
        %v181 = vld [vmem:[%s161 + $0x38] sm:$0xff]
        %v182 = vld [vmem:[%s161 + $0x40] sm:$0xff]
        %v183 = vld [vmem:[%s161 + $0x48] sm:$0xff]
        %v184 = vld [vmem:[%s161 + $0x50] sm:$0xff]
        %v185 = vld [vmem:[%s161 + $0x58] sm:$0xff]
        %v186 = vld [vmem:[%s161 + $0x60] sm:$0xff]
        %v187 = vld [vmem:[%s161 + $0x68] sm:$0xff]
        %v188 = vld [vmem:[%s1] sm:$0xff]
        %v189 = vld [vmem:[%s1 + $0x8] sm:$0xff]
        %v190 = vld [vmem:[%s1 + $0x10] sm:$0xff]
        %v191 = vld [vmem:[%s1 + $0x18] sm:$0xff]
        %v192 = vld [vmem:[%s1 + $0x20] sm:$0xff]
        %v193 = vld [vmem:[%s1 + $0x28] sm:$0xff]
        %v194 = vld [vmem:[%s1 + $0x30] sm:$0xff]
        %v195 = vld [vmem:[%s1 + $0x38] sm:$0xff]
        %v196 = vld [vmem:[%s1 + $0x40] sm:$0xff]
        %v197 = vld [vmem:[%s1 + $0x48] sm:$0xff]
        %v198 = vld [vmem:[%s1 + $0x50] sm:$0xff]
        %v199 = vld [vmem:[%s1 + $0x58] sm:$0xff]
        %v200 = vld [vmem:[%s1 + $0x60] sm:$0xff]
        %v201 = vld [vmem:[%s1 + $0x68] sm:$0xff]
        %v202 = vld [vmem:[%s1 + $0x70] sm:$0xff]
        %v203 = vld [vmem:[%s1 + $0x78] sm:$0xff]
        %v204 = vld [vmem:[%s1 + $0x80] sm:$0xff]
        %v205 = vld [vmem:[%s1 + $0x88] sm:$0xff]
        %v206 = vld [vmem:[%s1 + $0x90] sm:$0xff]
        %v207 = vld [vmem:[%s1 + $0x98] sm:$0xff]
        %v208 = vld [vmem:[%s1 + $0xa0] sm:$0xff]
        %v209 = vld [vmem:[%s1 + $0xa8] sm:$0xff]
        %v210 = vld [vmem:[%s1 + $0xb0] sm:$0xff]
        %v211 = vld [vmem:[%s1 + $0xb8] sm:$0xff]
        %v212 = vld [vmem:[%s1 + $0xc0] sm:$0xff]
        %v213 = vld [vmem:[%s1 + $0xc8] sm:$0xff]
        %v214 = vld [vmem:[%s1 + $0xd0] sm:$0xff]
        %v215 = vld [vmem:[%s1 + $0xd8] sm:$0xff]
        %v216 = vld [vmem:[%s1 + $0xe0] sm:$0xff]
        %v217 = vld [vmem:[%s1 + $0xe8] sm:$0xff]
        %v218 = vld [vmem:[%s1 + $0xf0] sm:$0xff]
        %v219 = vld [vmem:[%s1 + $0xf8] sm:$0xff]
        %v220 = vpack.c.bf16 %v189, %v188
        %v221 = vpack.c.bf16 %v191, %v190
        %v222 = vpack.c.bf16 %v193, %v192
        %v223 = vpack.c.bf16 %v195, %v194
        %v224 = vpack.c.bf16 %v197, %v196
        %v225 = vpack.c.bf16 %v199, %v198
        %v226 = vpack.c.bf16 %v201, %v200
        %v227 = vpack.c.bf16 %v203, %v202
        %v228 = vpack.c.bf16 %v205, %v204
        %v229 = vpack.c.bf16 %v207, %v206
        %v230 = vpack.c.bf16 %v209, %v208
        %v231 = vpack.c.bf16 %v211, %v210
        %v232 = vpack.c.bf16 %v213, %v212
        %v233 = vpack.c.bf16 %v215, %v214
        %v234 = vpack.c.bf16 %v217, %v216
        %v235 = vpack.c.bf16 %v219, %v218
        %v250 = vunpack.c.l.b16 %v174
        %v251 = vunpack.c.h.b16 %v174
        %v252 = vunpack.c.l.b16 %v175
        %v253 = vunpack.c.h.b16 %v175
        %v254 = vunpack.c.l.b16 %v176
        %v255 = vunpack.c.h.b16 %v176
        %v256 = vunpack.c.l.b16 %v177
        %v257 = vunpack.c.h.b16 %v177
        %v258 = vunpack.c.l.b16 %v178
        %v259 = vunpack.c.h.b16 %v178
        %v260 = vunpack.c.l.b16 %v179
        %v261 = vunpack.c.h.b16 %v179
        %v262 = vunpack.c.l.b16 %v180
        %v263 = vunpack.c.h.b16 %v180
        %v264 = vunpack.c.l.b16 %v181
        %v265 = vunpack.c.h.b16 %v181
        %v266 = vunpack.c.l.b16 %v182
        %v267 = vunpack.c.h.b16 %v182
        %v268 = vunpack.c.l.b16 %v183
        %v269 = vunpack.c.h.b16 %v183
        %v270 = vunpack.c.l.b16 %v184
        %v271 = vunpack.c.h.b16 %v184
        %v272 = vunpack.c.l.b16 %v185
        %v273 = vunpack.c.h.b16 %v185
        %v274 = vunpack.c.l.b16 %v186
        %v275 = vunpack.c.h.b16 %v186
        %v276 = vunpack.c.l.b16 %v187
        %v277 = vunpack.c.h.b16 %v187
        %v278 = vpack.c.b16 %v252, %v250
        %v279 = vpack.c.b16 %v253, %v251
        %v280 = vpack.c.b16 %v256, %v254
        %v281 = vpack.c.b16 %v257, %v255
        %v282 = vpack.c.b16 %v260, %v258
        %v283 = vpack.c.b16 %v261, %v259
        %v284 = vpack.c.b16 %v264, %v262
        %v285 = vpack.c.b16 %v265, %v263
        %v286 = vpack.c.b16 %v268, %v266
        %v287 = vpack.c.b16 %v269, %v267
        %v288 = vpack.c.b16 %v272, %v270
        %v289 = vpack.c.b16 %v273, %v271
        %v290 = vpack.c.b16 %v276, %v274
        %v291 = vpack.c.b16 %v277, %v275
        %306 = vmatprep.subr.bf16.mxu0 0
        %307 = vmatpush1.bf16.msra.mxu0 %v227
        %308 = vmatprep.subr.bf16.mxu0 0
        %309 = vmatpush1.bf16.msra.mxu0 %v226
        %310 = vmatprep.subr.bf16.mxu0 0
        %311 = vmatpush1.bf16.msra.mxu0 %v225
        %312 = vmatprep.subr.bf16.mxu0 0
        %313 = vmatpush1.bf16.msra.mxu0 %v224
        %314 = vmatprep.subr.bf16.mxu0 0
        %315 = vmatpush1.bf16.msra.mxu0 %v223
        %316 = vmatprep.subr.bf16.mxu0 0
        %317 = vmatpush1.bf16.msra.mxu0 %v222
        %318 = vmatprep.subr.bf16.mxu0 0
        %319 = vmatpush1.bf16.msra.mxu0 %v221
        %320 = vmatprep.subr.bf16.mxu0 0
        %321 = vmatpush1.bf16.msra.mxu0 %v220
        %322 = vmatprep.subr.bf16.mxu0 0
        %323 = vmatpush2.bf16.msra.mxu0 %v235
        %324 = vmatprep.subr.bf16.mxu0 0
        %325 = vmatpush2.bf16.msra.mxu0 %v234
        %326 = vmatprep.subr.bf16.mxu0 0
        %327 = vmatpush2.bf16.msra.mxu0 %v233
        %328 = vmatprep.subr.bf16.mxu0 0
        %329 = vmatpush2.bf16.msra.mxu0 %v232
        %330 = vmatprep.subr.bf16.mxu0 0
        %331 = vmatpush2.bf16.msra.mxu0 %v231
        %332 = vmatprep.subr.bf16.mxu0 0
        %333 = vmatpush2.bf16.msra.mxu0 %v230
        %334 = vmatprep.subr.bf16.mxu0 0
        %335 = vmatpush2.bf16.msra.mxu0 %v229
        %336 = vmatprep.subr.bf16.mxu0 0
        %337 = vmatpush2.bf16.msra.mxu0 %v228
        %338 = vmatprep.mubr.bf16.mxu0 %v279
        %339 = vmatmul.mubr.bf16.gmra.mxu0 %v278
        %v340 = vpop.f32.mrf.mxu0
        %v341 = vadd.f32 0.0, %v340
        %v342 = vpop.f32.mrf.mxu0
        %v343 = vpop.f32.mrf.mxu0
        %v344 = vadd.f32 0.0, %v343
        %v345 = vpop.f32.mrf.mxu0
        %346 = vmatprep.mubr.bf16.mxu0 %v281
        %347 = vmatmul.mubr.bf16.gmra.mxu0 %v280
        %v348 = vpop.f32.mrf.mxu0
        %v349 = vadd.f32 0.0, %v348
        %v350 = vpop.f32.mrf.mxu0
        %v351 = vpop.f32.mrf.mxu0
        %v352 = vadd.f32 0.0, %v351
        %v353 = vpop.f32.mrf.mxu0
        %354 = vmatprep.mubr.bf16.mxu0 %v283
        %355 = vmatmul.mubr.bf16.gmra.mxu0 %v282
        %v356 = vpop.f32.mrf.mxu0
        %v357 = vadd.f32 0.0, %v356
        %v358 = vpop.f32.mrf.mxu0
        %v359 = vpop.f32.mrf.mxu0
        %v360 = vadd.f32 0.0, %v359
        %v361 = vpop.f32.mrf.mxu0
        %362 = vmatprep.mubr.bf16.mxu0 %v285
        %363 = vmatmul.mubr.bf16.gmra.mxu0 %v284
        %v364 = vpop.f32.mrf.mxu0
        %v365 = vadd.f32 0.0, %v364
        %v366 = vpop.f32.mrf.mxu0
        %v367 = vpop.f32.mrf.mxu0
        %v368 = vadd.f32 0.0, %v367
        %v369 = vpop.f32.mrf.mxu0
        %370 = vmatprep.mubr.bf16.mxu0 %v287
        %371 = vmatmul.mubr.bf16.gmra.mxu0 %v286
        %v372 = vpop.f32.mrf.mxu0
        %v373 = vadd.f32 0.0, %v372
        %v374 = vpop.f32.mrf.mxu0
        %v375 = vpop.f32.mrf.mxu0
        %v376 = vadd.f32 0.0, %v375
        %v377 = vpop.f32.mrf.mxu0
        %378 = vmatprep.mubr.bf16.mxu0 %v289
        %379 = vmatmul.mubr.bf16.gmra.mxu0 %v288
        %v380 = vpop.f32.mrf.mxu0
        %v381 = vadd.f32 0.0, %v380
        %v382 = vpop.f32.mrf.mxu0
        %v383 = vpop.f32.mrf.mxu0
        %v384 = vadd.f32 0.0, %v383
        %v385 = vpop.f32.mrf.mxu0
        %386 = vmatprep.mubr.bf16.mxu0 %v291
        %387 = vmatmul.mubr.bf16.gmra.mxu0 %v290
        %v388 = vpop.f32.mrf.mxu0
        %v389 = vadd.f32 0.0, %v388
        %v390 = vpop.f32.mrf.mxu0
        %v391 = vpop.f32.mrf.mxu0
        %v392 = vadd.f32 0.0, %v391
        %v393 = vpop.f32.mrf.mxu0
        %394 = vdwg.mxu0
        %vm395 = vcmask 261120
        %396 = vst.msk [vmem:[%s150] sm:$0xff] %vm395, %v341
        %397 = vst.msk [vmem:[%s150 + $0x8] sm:$0xff] %vm395, %v344
        %398 = vst.msk [vmem:[%s150 + $0x10] sm:$0xff] %vm395, %v349
        %399 = vst.msk [vmem:[%s150 + $0x18] sm:$0xff] %vm395, %v352
        %400 = vst.msk [vmem:[%s150 + $0x20] sm:$0xff] %vm395, %v357
        %401 = vst.msk [vmem:[%s150 + $0x28] sm:$0xff] %vm395, %v360
        %402 = vst.msk [vmem:[%s150 + $0x30] sm:$0xff] %vm395, %v365
        %403 = vst.msk [vmem:[%s150 + $0x38] sm:$0xff] %vm395, %v368
        %404 = vst.msk [vmem:[%s150 + $0x40] sm:$0xff] %vm395, %v373
        %405 = vst.msk [vmem:[%s150 + $0x48] sm:$0xff] %vm395, %v376
        %406 = vst.msk [vmem:[%s150 + $0x50] sm:$0xff] %vm395, %v381
        %407 = vst.msk [vmem:[%s150 + $0x58] sm:$0xff] %vm395, %v384
        %408 = vst.msk [vmem:[%s150 + $0x60] sm:$0xff] %vm395, %v389
        %409 = vst.msk [vmem:[%s150 + $0x68] sm:$0xff] %vm395, %v392
        %s410 = sand.u32 %s68, 1
        %s411 = sand.u32 %s68, 1
        %s412 = smul.addr %s411, 112
        %s413 = scalar_lea.vmem [#allocation2], %s412
        // Predicated region
        $region29: #{content_matmul.1} parent=27 // pred_check
          %p414 = pneg %p78
        $region30: #{content_matmul.1} parent=27 // pred_check_branch
          %416 = sbr.rel (%p414) target = $region32
        $region31: #{content_matmul.1} parent=27 // pred_region
          %s417 = smul.u32 14, %s13
          %s418 = ssub.s32 25, %s417
          %p419 = scmp.lt.s32.totalorder %s418, 14
          %s420 = scalar_select %p419, %s418, 14
          %s421 = smul.u32 128, %s420
          %p422 = scmp.ne.s32.totalorder 0, %s421
          %s423 = smul.addr %s417, 8
          %s424 = scalar_lea.vmem %s2, %s423
          // Predicated region
          $region33: #{content_matmul.1} parent=31 // pred_check
            %p425 = pneg %p422
          $region34: #{content_matmul.1} parent=31 // pred_check_branch
            %427 = sbr.rel (%p425) target = $region36
          $region35: #{content_matmul.1} parent=31 // pred_region
            // Predicated region
            $region37: #{content_matmul.1} parent=35 // pred_check
              _
            $region38: #{content_matmul.1} parent=35 // pred_check_branch
              %429 = sbr.rel (0) target = $region40
            $region39: #{content_matmul.1} parent=35 // pred_region
              // Predicated region
              $region59: #{content_matmul.1} parent=39 // pred_check
                _
              $region60: #{content_matmul.1} parent=39 // pred_check_branch
                %506 = sbr.rel (0) target = $region62
              $region61: #{content_matmul.1} parent=39 // pred_region
                %s507 = sdiv.u32.pop %s420, 14
                %s508 = srem.u32.pop %s420, 14
                // While loop
                $region63: #{content_matmul.1} parent=61 // loop_pre_header
                  _
                $region64: #{content_matmul.1} parent=61 // loop_header
                  %s510 = sphi 0, %s512
                  %p511 = scmp.ge.s32.totalorder %s510, %s507
                  %s515 = sphi 0, %s548
                  %s516 = sphi %s413, %s551
                  %s517 = sphi %s424, %s552
                $region65: #{content_matmul.1} parent=61 // loop_header_branch
                  %514 = sbr.rel (%p511) target = $region69
                $region66: #{content_matmul.1} parent=61 // loop_body
                  %v518 = vld [vmem:[%s516] sm:$0xff]
                  %519 = vst [vmem:[%s517] sm:$0xff] %v518
                  %v520 = vld [vmem:[%s516 + $0x8] sm:$0xff]
                  %521 = vst [vmem:[%s517 + $0x8] sm:$0xff] %v520
                  %v522 = vld [vmem:[%s516 + $0x10] sm:$0xff]
                  %523 = vst [vmem:[%s517 + $0x10] sm:$0xff] %v522
                  %v524 = vld [vmem:[%s516 + $0x18] sm:$0xff]
                  %525 = vst [vmem:[%s517 + $0x18] sm:$0xff] %v524
                  %v526 = vld [vmem:[%s516 + $0x20] sm:$0xff]
                  %527 = vst [vmem:[%s517 + $0x20] sm:$0xff] %v526
                  %v528 = vld [vmem:[%s516 + $0x28] sm:$0xff]
                  %529 = vst [vmem:[%s517 + $0x28] sm:$0xff] %v528
                  %v530 = vld [vmem:[%s516 + $0x30] sm:$0xff]
                  %531 = vst [vmem:[%s517 + $0x30] sm:$0xff] %v530
                  %v532 = vld [vmem:[%s516 + $0x38] sm:$0xff]
                  %533 = vst [vmem:[%s517 + $0x38] sm:$0xff] %v532
                  %v534 = vld [vmem:[%s516 + $0x40] sm:$0xff]
                  %535 = vst [vmem:[%s517 + $0x40] sm:$0xff] %v534
                  %v536 = vld [vmem:[%s516 + $0x48] sm:$0xff]
                  %537 = vst [vmem:[%s517 + $0x48] sm:$0xff] %v536
                  %v538 = vld [vmem:[%s516 + $0x50] sm:$0xff]
                  %539 = vst [vmem:[%s517 + $0x50] sm:$0xff] %v538
                  %v540 = vld [vmem:[%s516 + $0x58] sm:$0xff]
                  %541 = vst [vmem:[%s517 + $0x58] sm:$0xff] %v540
                  %v542 = vld [vmem:[%s516 + $0x60] sm:$0xff]
                  %543 = vst [vmem:[%s517 + $0x60] sm:$0xff] %v542
                  %v544 = vld [vmem:[%s516 + $0x68] sm:$0xff]
                  %545 = vst [vmem:[%s517 + $0x68] sm:$0xff] %v544
                  %s546 = sadd.s32 1, %s515
                  %p547 = scmp.ge.s32.totalorder %s546, %s507
                  %s548 = scalar_select %p547, 0, %s546
                  %s549 = smul.u32 %s548, 112
                  %s550 = smul.u32 %s548, 112
                  %s551 = scalar_lea.vmem %s413, %s549 [#allocation2]
                  %s552 = scalar_lea.vmem %s424, %s550
                $region67: #{content_matmul.1} parent=61 // loop_footer
                  %s512 = sadd.s32 %s510, 1
                $region68: #{content_matmul.1} parent=61 // loop_footer_branch
                  %509 = sbr.rel target = $region64
                $region69: #{content_matmul.1} parent=61 // loop_exit
                  _
                %s553 = sdiv.u32.pop %s420, 14
                %s554 = srem.u32.pop %s420, 14
                %s555 = smul.u32 %s553, 14
                %s556 = smul.u32 8, %s555
                %s557 = scalar_lea.vmem %s413, %s556 [#allocation2]
                %s558 = smul.u32 8, %s555
                %s559 = scalar_lea.vmem %s424, %s558
                // While loop
                $region70: #{content_matmul.1} parent=61 // loop_pre_header
                  _
                $region71: #{content_matmul.1} parent=61 // loop_header
                  %s561 = sphi 0, %s563
                  %p562 = scmp.ge.s32.totalorder %s561, %s554
                  %s566 = sphi 0, %s573
                  %s567 = sphi %s557, %s576
                  %s568 = sphi %s559, %s577
                $region72: #{content_matmul.1} parent=61 // loop_header_branch
                  %565 = sbr.rel (%p562) target = $region76
                $region73: #{content_matmul.1} parent=61 // loop_body
                  %v569 = vld [vmem:[%s567] sm:$0xff]
                  %570 = vst [vmem:[%s568] sm:$0xff] %v569
                  %s571 = sadd.s32 1, %s566
                  %p572 = scmp.ge.s32.totalorder %s571, %s554
                  %s573 = scalar_select %p572, 0, %s571
                  %s574 = smul.u32 %s573, 8
                  %s575 = smul.u32 %s573, 8
                  %s576 = scalar_lea.vmem %s557, %s574 [#allocation2]
                  %s577 = scalar_lea.vmem %s559, %s575
                $region74: #{content_matmul.1} parent=61 // loop_footer
                  %s563 = sadd.s32 %s561, 1
                $region75: #{content_matmul.1} parent=61 // loop_footer_branch
                  %560 = sbr.rel target = $region71
                $region76: #{content_matmul.1} parent=61 // loop_exit
                  _
              $region62: #{content_matmul.1} parent=39 // pred_fallthru
                _
              // Predicated region
              $region77: #{content_matmul.1} parent=39 // pred_check
                _
              $region78: #{content_matmul.1} parent=39 // pred_check_branch
                %579 = sbr.rel target = $region80
              $region79: #{content_matmul.1} parent=39 // pred_region
                _
              $region80: #{content_matmul.1} parent=39 // pred_fallthru
                _
            $region40: #{content_matmul.1} parent=35 // pred_fallthru
              _
            // Predicated region
            $region41: #{content_matmul.1} parent=35 // pred_check
              _
            $region42: #{content_matmul.1} parent=35 // pred_check_branch
              %431 = sbr.rel target = $region44
            $region43: #{content_matmul.1} parent=35 // pred_region
              %s433 = ssub.s32 256, 1
              %s434 = sdiv.u32.pop %s420, 14
              %s435 = srem.u32.pop %s420, 14
              // While loop
              $region45: #{content_matmul.1} parent=43 // loop_pre_header
                _
              $region46: #{content_matmul.1} parent=43 // loop_header
                %s437 = sphi 0, %s439
                %p438 = scmp.ge.s32.totalorder %s437, %s434
                %s442 = sphi 0, %s475
                %s443 = sphi %s413, %s478
                %s444 = sphi %s424, %s479
              $region47: #{content_matmul.1} parent=43 // loop_header_branch
                %441 = sbr.rel (%p438) target = $region51
              $region48: #{content_matmul.1} parent=43 // loop_body
                %v445 = vld [vmem:[%s443] sm:%s433]
                %446 = vst [vmem:[%s444] sm:%s433] %v445
                %v447 = vld [vmem:[%s443 + $0x8] sm:%s433]
                %448 = vst [vmem:[%s444 + $0x8] sm:%s433] %v447
                %v449 = vld [vmem:[%s443 + $0x10] sm:%s433]
                %450 = vst [vmem:[%s444 + $0x10] sm:%s433] %v449
                %v451 = vld [vmem:[%s443 + $0x18] sm:%s433]
                %452 = vst [vmem:[%s444 + $0x18] sm:%s433] %v451
                %v453 = vld [vmem:[%s443 + $0x20] sm:%s433]
                %454 = vst [vmem:[%s444 + $0x20] sm:%s433] %v453
                %v455 = vld [vmem:[%s443 + $0x28] sm:%s433]
                %456 = vst [vmem:[%s444 + $0x28] sm:%s433] %v455
                %v457 = vld [vmem:[%s443 + $0x30] sm:%s433]
                %458 = vst [vmem:[%s444 + $0x30] sm:%s433] %v457
                %v459 = vld [vmem:[%s443 + $0x38] sm:%s433]
                %460 = vst [vmem:[%s444 + $0x38] sm:%s433] %v459
                %v461 = vld [vmem:[%s443 + $0x40] sm:%s433]
                %462 = vst [vmem:[%s444 + $0x40] sm:%s433] %v461
                %v463 = vld [vmem:[%s443 + $0x48] sm:%s433]
                %464 = vst [vmem:[%s444 + $0x48] sm:%s433] %v463
                %v465 = vld [vmem:[%s443 + $0x50] sm:%s433]
                %466 = vst [vmem:[%s444 + $0x50] sm:%s433] %v465
                %v467 = vld [vmem:[%s443 + $0x58] sm:%s433]
                %468 = vst [vmem:[%s444 + $0x58] sm:%s433] %v467
                %v469 = vld [vmem:[%s443 + $0x60] sm:%s433]
                %470 = vst [vmem:[%s444 + $0x60] sm:%s433] %v469
                %v471 = vld [vmem:[%s443 + $0x68] sm:%s433]
                %472 = vst [vmem:[%s444 + $0x68] sm:%s433] %v471
                %s473 = sadd.s32 1, %s442
                %p474 = scmp.ge.s32.totalorder %s473, %s434
                %s475 = scalar_select %p474, 0, %s473
                %s476 = smul.u32 %s475, 112
                %s477 = smul.u32 %s475, 112
                %s478 = scalar_lea.vmem %s413, %s476 [#allocation2]
                %s479 = scalar_lea.vmem %s424, %s477
              $region49: #{content_matmul.1} parent=43 // loop_footer
                %s439 = sadd.s32 %s437, 1
              $region50: #{content_matmul.1} parent=43 // loop_footer_branch
                %436 = sbr.rel target = $region46
              $region51: #{content_matmul.1} parent=43 // loop_exit
                _
              %s480 = sdiv.u32.pop %s420, 14
              %s481 = srem.u32.pop %s420, 14
              %s482 = smul.u32 %s480, 14
              %s483 = smul.u32 8, %s482
              %s484 = scalar_lea.vmem %s413, %s483 [#allocation2]
              %s485 = smul.u32 8, %s482
              %s486 = scalar_lea.vmem %s424, %s485
              // While loop
              $region52: #{content_matmul.1} parent=43 // loop_pre_header
                _
              $region53: #{content_matmul.1} parent=43 // loop_header
                %s488 = sphi 0, %s490
                %p489 = scmp.ge.s32.totalorder %s488, %s481
                %s493 = sphi 0, %s500
                %s494 = sphi %s484, %s503
                %s495 = sphi %s486, %s504
              $region54: #{content_matmul.1} parent=43 // loop_header_branch
                %492 = sbr.rel (%p489) target = $region58
              $region55: #{content_matmul.1} parent=43 // loop_body
                %v496 = vld [vmem:[%s494] sm:%s433]
                %497 = vst [vmem:[%s495] sm:%s433] %v496
                %s498 = sadd.s32 1, %s493
                %p499 = scmp.ge.s32.totalorder %s498, %s481
                %s500 = scalar_select %p499, 0, %s498
                %s501 = smul.u32 %s500, 8
                %s502 = smul.u32 %s500, 8
                %s503 = scalar_lea.vmem %s484, %s501 [#allocation2]
                %s504 = scalar_lea.vmem %s486, %s502
              $region56: #{content_matmul.1} parent=43 // loop_footer
                %s490 = sadd.s32 %s488, 1
              $region57: #{content_matmul.1} parent=43 // loop_footer_branch
                %487 = sbr.rel target = $region53
              $region58: #{content_matmul.1} parent=43 // loop_exit
                _
            $region44: #{content_matmul.1} parent=35 // pred_fallthru
              _
          $region36: #{content_matmul.1} parent=31 // pred_fallthru
            _
          %580 = vnop
        $region32: #{content_matmul.1} parent=27 // pred_fallthru
          _
      $region28: #{content_matmul.1} parent=5 // pred_fallthru
        _
      %p581 = scmp.le.s32.totalorder 2, %s8
      // Predicated region
      $region81: #{content_matmul.1} parent=5 // pred_check
        %p582 = pneg %p581
      $region82: #{content_matmul.1} parent=5 // pred_check_branch
        %584 = sbr.rel (%p582) target = $region84
      $region83: #{content_matmul.1} parent=5 // pred_region
        %s585 = ssub.s32 %s8, 2
        // Predicated region
        $region85: #{content_matmul.1} parent=83 // pred_check
          %p586 = pneg %p84
        $region86: #{content_matmul.1} parent=83 // pred_check_branch
          %588 = sbr.rel (%p586) target = $region88
        $region87: #{content_matmul.1} parent=83 // pred_region
          %s589 = sand.u32 %s69, 1
          %s590 = sand.u32 %s69, 1
          %s591 = smul.addr %s590, 112
          %s592 = scalar_lea.vmem [#allocation2], %s591
        $region88: #{content_matmul.1} parent=83 // pred_fallthru
          _
      $region84: #{content_matmul.1} parent=5 // pred_fallthru
        _
    $region6: #{content_matmul.1} parent=1 // loop_footer
      %s12 = sadd.s32 1, %s8
    $region7: #{content_matmul.1} parent=1 // loop_footer_branch
      %7 = sbr.rel target = $region3
    $region8: #{content_matmul.1} parent=1 // loop_exit
      _

</llo_original>
